<compile_context>
chip_gen: v7x
topology: tpu7x:2x2x1
jax: 0.10.0
libtpu: 0.0.40
codegen_flags: <defaults>
</compile_context>

<pallas_src>
import functools
import math

import jax
import jax.numpy as jnp
import numpy as np
from jax import lax
from jax.experimental import pallas as pl
from jax.experimental.pallas import tpu as pltpu


def _round_up(x, m):
    return ((x + m - 1) // m) * m


def _make_inv_freq(dim, base):
    # Matches torch: 1 / base ** (arange(0, dim, 2).float() / dim)
    exponents = np.arange(0, dim, 2, dtype=np.float32) / np.float32(dim)
    return (1.0 / (np.float64(base) ** exponents.astype(np.float64))).astype(np.float32)


def _rope_kernel(patt_ref, cos_ref, sin_ref, *, k, half, duplicate):
    """Compute one lane-dense tile of the rotary cos/sin caches.

    patt_ref : (3, Wc) f32 in VMEM, constant index_map (fetched once).
        row 0 = inv_freq per lane
        row 1 = intra-tile position offset per lane
        row 2 = even-chunk flag (only used on the non-duplicate path)
    cos_ref / sin_ref : (To, Wo) output tiles, Wo % 128 == 0.
    """
    to_rows = cos_ref.shape[0]
    wc = patt_ref.shape[1]
    out_dtype = cos_ref.dtype

    inv = patt_ref[0:1, :]                       # (1, Wc)
    base = (pl.program_id(0) * (to_rows * k)).astype(jnp.float32)

    if duplicate:
        # dim % 256 == 0: one position per row, unique half per lane (Wc = half).
        row = lax.broadcasted_iota(jnp.int32, (to_rows, wc), 0).astype(jnp.float32)
        ang = (base + row) * inv                 # (To, half)
        c = jnp.cos(ang).astype(out_dtype)       # cast BEFORE duplicating
        s = jnp.sin(ang).astype(out_dtype)
        cos_ref[:, :half] = c
        cos_ref[:, half:] = c
        sin_ref[:, :half] = s
        sin_ref[:, half:] = s
    else:
        # Two output row-groups (rows [0,Tc) and [Tc,To)) share one compute row:
        # compute row r holds, chunk-interleaved, the unique halves of output row
        # r and output row r+Tc. Trig runs once on this lane-dense layout.
        tc_rows = to_rows // 2
        off = patt_ref[1:2, :]                   # (1, Wo) per-lane position offset
        even = patt_ref[2:3, :] > 0.5            # (1, Wo) chunk-parity mask

        row = lax.broadcasted_iota(jnp.int32, (tc_rows, wc), 0).astype(jnp.float32)
        ang = (base + row * float(k) + off) * inv          # (Tc, Wo)
        c = jnp.cos(ang)
        s = jnp.sin(ang)

        wo = wc
        shift_a = half               # chunk i <- chunk i-1
        shift_b = (wo - half) % wo   # chunk i <- chunk i+1

        def expand(x):
            ra = pltpu.roll(x, shift=shift_a, axis=1)
            rb = ra if shift_b == shift_a else pltpu.roll(x, shift=shift_b, axis=1)
            grp_a = jnp.where(even, x, ra)       # output rows [0, Tc)
            grp_b = jnp.where(even, rb, x)       # output rows [Tc, To)
            return grp_a.astype(out_dtype), grp_b.astype(out_dtype)

        ca, cb = expand(c)
        cos_ref[0:tc_rows, :] = ca
        cos_ref[tc_rows:, :] = cb
        sa, sb = expand(s)
        sin_ref[0:tc_rows, :] = sa
        sin_ref[tc_rows:, :] = sb


class BailingMoeRotaryEmbedding:
    """JAX/Pallas port of the PyTorch BailingMoeRotaryEmbedding module.

    The cache is built lazily on the first call (the PyTorch module resets
    max_seq_len_cached to None after __init__, so its first forward also
    rebuilds the cache with x.dtype -> identical forward outputs).
    """

    def __init__(self, dim, max_position_embeddings=2048, base=10000, device=None,
                 *, max_tile_rows=8192):
        del device  # unused (JAX manages placement)
        assert dim % 2 == 0, "rotary dim must be even"
        self.dim = dim
        self.max_position_embeddings = max_position_embeddings
        self.base = base
        self._max_tile_rows = int(max_tile_rows)
        self._inv_freq_np = _make_inv_freq(dim, base)          # (dim//2,)
        self.inv_freq = jnp.asarray(self._inv_freq_np)         # mirrors the torch buffer
        self.max_seq_len_cached = None
        self.cos_cached = None
        self.sin_cached = None

    # ------------------------------------------------------------------ cache
    def _compute_cos_sin(self, seq_len, dtype):
        dim = self.dim
        half = dim // 2

        # Output lane packing: k positions per packed row -> width_out % 128 == 0.
        k = 128 // math.gcd(dim, 128)
        width_out = k * dim
        duplicate = (half % 128 == 0)            # dim % 256 == 0
        width_c = half if duplicate else width_out

        # ---- tile sizing: generation-aware VMEM budget drives it ------------
        itemsize = jnp.dtype(dtype).itemsize
        try:
            vmem_cap = int(pltpu.get_tpu_info().vmem_capacity_bytes)
            if vmem_cap <= 0:
                vmem_cap = 64 << 20
        except Exception:
            vmem_cap = 64 << 20                  # conservative (v7x per-TC)
        budget = min(40 << 20, vmem_cap // 2)
        # Per output row: 2 outputs x 2 pipeline buffers in `dtype` plus f32
        # intermediates (pos/ang/cos/sin/rolled/selected can each materialize).
        bytes_per_row = 4 * width_out * itemsize + 8 * width_out * 4
        row_align = 8 if duplicate else 16       # non-dup path needs even To
        max_rows_vmem = max(row_align,
                            (budget // bytes_per_row) // row_align * row_align)

        total_rows = pl.cdiv(seq_len, k)
        tile_rows = min(self._max_tile_rows, max_rows_vmem,
                        _round_up(total_rows, row_align))
        # Keep >= 2 parallel tiles when there is enough work (v7x: 2 TensorCores).
        if total_rows >= 2 * row_align:
            tile_rows = min(tile_rows, _round_up(pl.cdiv(total_rows, 2), row_align))
        tile_rows = max(row_align, (tile_rows // row_align) * row_align)
        n_tiles = pl.cdiv(total_rows, tile_rows)
        padded_rows = n_tiles * tile_rows
        padded_seq = padded_rows * k

        # ---- per-lane patterns (tiny; constant index_map -> fetched once) ---
        inv_host = self._inv_freq_np
        if duplicate:
            inv_patt = inv_host.astype(np.float32)                 # (half,)
            off_patt = np.zeros((half,), np.float32)
            even_patt = np.zeros((half,), np.float32)              # unused
        else:
            tc = tile_rows // 2
            lane = np.arange(width_out)
            chunk = lane // half
            j = chunk // 2                 # position index within an output row
            grp = chunk % 2                # 0 -> rows [0,Tc), 1 -> rows [Tc,To)
            inv_patt = inv_host[lane % half].astype(np.float32)
            off_patt = (j + grp * (tc * k)).astype(np.float32)
            even_patt = (grp == 0).astype(np.float32)
        patt = jnp.asarray(np.stack([inv_patt, off_patt, even_patt], axis=0),
                           dtype=jnp.float32)                      # (3, Wc)

        # ---- explicit VMEM limit so the big tiles are portable ---------------
        est_vmem = tile_rows * bytes_per_row + (2 << 20)
        vmem_limit = int(max(16 << 20,
                             min(vmem_cap - (8 << 20), est_vmem + (16 << 20))))

        kernel = functools.partial(_rope_kernel, k=k, half=half, duplicate=duplicate)
        cos_p, sin_p = pl.pallas_call(
            kernel,
            out_shape=(
                jax.ShapeDtypeStruct((padded_rows, width_out), dtype),
                jax.ShapeDtypeStruct((padded_rows, width_out), dtype),
            ),
            grid_spec=pltpu.PrefetchScalarGridSpec(
                num_scalar_prefetch=0,
                grid=(n_tiles,),
                in_specs=[pl.BlockSpec((3, width_c), lambda i: (0, 0))],
                out_specs=[
                    pl.BlockSpec((tile_rows, width_out), lambda i: (i, 0)),
                    pl.BlockSpec((tile_rows, width_out), lambda i: (i, 0)),
                ],
            ),
            compiler_params=pltpu.CompilerParams(
                dimension_semantics=("parallel",),
                vmem_limit_bytes=vmem_limit,
            ),
        )(patt)

        # Packed rows -> (padded_seq, dim): contiguous row-major reshape.
        # TODO(synk): for dim < 128 verify via HLO/xprof that this reshape does not
        # force an XLA relayout copy; if it does, keep the cache in packed
        # (padded_rows, k*dim) form and unpack inside the rotary-apply consumer.
        return (cos_p.reshape(padded_seq, dim),
                sin_p.reshape(padded_seq, dim),
                padded_seq)

    def _set_cos_sin_cache(self, seq_len, dtype):
        cos, sin, padded_seq = self._compute_cos_sin(seq_len, dtype)
        # Record what the cache physically covers (>= requested seq_len) so later
        # calls inside the padding do not trigger a pointless rebuild.
        self.max_seq_len_cached = padded_seq
        self.cos_cached = cos
        self.sin_cached = sin

    # ---------------------------------------------------------------- forward
    def __call__(self, x, seq_len=None):
        if self.max_seq_len_cached is None or seq_len > self.max_seq_len_cached:
            self._set_cos_sin_cache(seq_len=seq_len, dtype=x.dtype)
        # astype is a no-op when dtypes already match (cache is built in x.dtype);
        # under jit the slice fuses into the consumer.
        return (
            self.cos_cached[:seq_len].astype(x.dtype),
            self.sin_cached[:seq_len].astype(x.dtype),
        )


# ------------------------------------------------------------------ reference
def _reference_cos_sin(dim, base, seq_len, dtype):
    inv_freq = _make_inv_freq(dim, base).astype(np.float64)
    t = np.arange(seq_len, dtype=np.float64)
    freqs = np.outer(t, inv_freq)
    emb = np.concatenate([freqs, freqs], axis=-1)
    return np.cos(emb).astype(dtype), np.sin(emb).astype(dtype)


if __name__ == "__main__":
    key = jax.random.PRNGKey(0)

    # Config 1: dim=32 (k=4 packing, roll+select expansion), tiny seq.
    batch, heads, seq_len, head_dim = 2, 4, 8, 32
    x = jax.random.normal(key, (batch, heads, seq_len, head_dim), dtype=jnp.float32)
    rope = BailingMoeRotaryEmbedding(dim=head_dim, max_position_embeddings=64)
    cos, sin = jax.block_until_ready(rope(x, seq_len=seq_len))
    ref_cos, ref_sin = _reference_cos_sin(head_dim, 10000, seq_len, np.float32)
    np.testing.assert_allclose(np.asarray(cos), ref_cos, rtol=1e-5, atol=1e-5)
    np.testing.assert_allclose(np.asarray(sin), ref_sin, rtol=1e-5, atol=1e-5)
    assert cos.shape == (seq_len, head_dim) and sin.shape == (seq_len, head_dim)

    # Config 2: dim=64 (k=2), non-tile-multiple seq_len, forced multi-tile grid.
    rope2 = BailingMoeRotaryEmbedding(dim=64, max_position_embeddings=512,
                                      max_tile_rows=16)
    x2 = jax.random.normal(key, (1, 2, 300, 64), dtype=jnp.float32)
    cos2, sin2 = jax.block_until_ready(rope2(x2, seq_len=300))
    ref_cos2, ref_sin2 = _reference_cos_sin(64, 10000, 300, np.float32)
    np.testing.assert_allclose(np.asarray(cos2), ref_cos2, rtol=1e-4, atol=1e-4)
    np.testing.assert_allclose(np.asarray(sin2), ref_sin2, rtol=1e-4, atol=1e-4)
    assert cos2.shape == (300, 64) and sin2.shape == (300, 64)

    # Config 3: dim=128 (k=1, the common head_dim; >=2 parallel tiles).
    rope3 = BailingMoeRotaryEmbedding(dim=128, max_position_embeddings=256)
    x3 = jax.random.normal(key, (1, 2, 48, 128), dtype=jnp.float32)
    cos3, sin3 = jax.block_until_ready(rope3(x3, seq_len=48))
    ref_cos3, ref_sin3 = _reference_cos_sin(128, 10000, 48, np.float32)
    np.testing.assert_allclose(np.asarray(cos3), ref_cos3, rtol=1e-4, atol=1e-4)
    np.testing.assert_allclose(np.asarray(sin3), ref_sin3, rtol=1e-4, atol=1e-4)
    assert cos3.shape == (48, 128)

    # Config 4: dim=256 (duplicate path: trig on the unique half only), bf16 cache.
    rope4 = BailingMoeRotaryEmbedding(dim=256, max_position_embeddings=64)
    x4 = jax.random.normal(key, (1, 1, 16, 256), dtype=jnp.bfloat16)
    cos4, sin4 = jax.block_until_ready(rope4(x4, seq_len=16))
    ref_cos4, ref_sin4 = _reference_cos_sin(256, 10000, 16, np.float32)
    np.testing.assert_allclose(np.asarray(cos4.astype(jnp.float32)), ref_cos4,
                               rtol=2e-2, atol=2e-2)
    np.testing.assert_allclose(np.asarray(sin4.astype(jnp.float32)), ref_sin4,
                               rtol=2e-2, atol=2e-2)
    assert cos4.shape == (16, 256) and cos4.dtype == jnp.bfloat16

    print("KERNEL_OK")
</pallas_src>

<mosaic_0001>
module attributes {stable_mosaic.version = 11 : i64} {
  func.func @_rope_kernel(%arg0: i32, %arg1: memref<3x128xf32, #tpu.memory_space<vmem>>, %arg2: memref<16x128xf32, #tpu.memory_space<vmem>>, %arg3: memref<16x128xf32, #tpu.memory_space<vmem>>) attributes {dimension_semantics = [#tpu.dimension_semantics<parallel>], iteration_bounds = array<i64: 1>, scalar_prefetch = 0 : i64, scratch_operands = 0 : i64, tpu.core_type = #tpu.core_type<tc>, window_params = [{pipeline_mode = #tpu.pipeline_mode<synchronous>, transform_indices = @transform_0, window_bounds = array<i64: 3, 128>}, {transform_indices = @transform_1, window_bounds = array<i64: 16, 128>}, {transform_indices = @transform_2, window_bounds = array<i64: 16, 128>}]} {
    %c0 = arith.constant 0 : index
    %c0_0 = arith.constant 0 : index
    %0 = vector.load %arg1[%c0, %c0_0] : memref<3x128xf32, #tpu.memory_space<vmem>>, vector<1x128xf32>
    %c64_i32 = arith.constant 64 : i32
    %1 = arith.muli %arg0, %c64_i32 : i32
    %2 = arith.sitofp %1 : i32 to f32
    %c1 = arith.constant 1 : index
    %c0_1 = arith.constant 0 : index
    %3 = vector.load %arg1[%c1, %c0_1] : memref<3x128xf32, #tpu.memory_space<vmem>>, vector<1x128xf32>
    %c2 = arith.constant 2 : index
    %c0_2 = arith.constant 0 : index
    %4 = vector.load %arg1[%c2, %c0_2] : memref<3x128xf32, #tpu.memory_space<vmem>>, vector<1x128xf32>
    %cst = arith.constant 5.000000e-01 : f32
    %5 = vector.broadcast %cst : f32 to vector<1x128xf32>
    %6 = arith.cmpf ogt, %4, %5 : vector<1x128xf32>
    %7 = tpu.iota {dimensions = array<i32: 0>} : vector<8x128xi32>
    %8 = arith.sitofp %7 : vector<8x128xi32> to vector<8x128xf32>
    %cst_3 = arith.constant 4.000000e+00 : f32
    %9 = vector.broadcast %cst_3 : f32 to vector<8x128xf32>
    %10 = arith.mulf %8, %9 : vector<8x128xf32>
    %11 = vector.broadcast %2 : f32 to vector<8x128xf32>
    %12 = arith.addf %11, %10 : vector<8x128xf32>
    %13 = vector.broadcast %3 : vector<1x128xf32> to vector<8x128xf32>
    %14 = arith.addf %12, %13 : vector<8x128xf32>
    %15 = vector.broadcast %0 : vector<1x128xf32> to vector<8x128xf32>
    %16 = arith.mulf %14, %15 : vector<8x128xf32>
    %17 = math.cos %16 : vector<8x128xf32>
    %18 = math.sin %16 : vector<8x128xf32>
    %c16_i32 = arith.constant 16 : i32
    %19 = tpu.dynamic_rotate %17 by %c16_i32 dim 1 : vector<8x128xf32>, i32 -> vector<8x128xf32>
    %c112_i32 = arith.constant 112 : i32
    %20 = tpu.dynamic_rotate %17 by %c112_i32 dim 1 : vector<8x128xf32>, i32 -> vector<8x128xf32>
    %21 = vector.shape_cast %6 : vector<1x128xi1> to vector<1x128xi1>
    %22 = vector.broadcast %21 : vector<1x128xi1> to vector<8x128xi1>
    %23 = arith.select %22, %17, %19 : vector<8x128xi1>, vector<8x128xf32>
    %24 = vector.shape_cast %6 : vector<1x128xi1> to vector<1x128xi1>
    %25 = vector.broadcast %24 : vector<1x128xi1> to vector<8x128xi1>
    %26 = arith.select %25, %20, %17 : vector<8x128xi1>, vector<8x128xf32>
    %c0_4 = arith.constant 0 : index
    %c0_5 = arith.constant 0 : index
    %27 = vector.load %arg2[%c0_4, %c0_5] : memref<16x128xf32, #tpu.memory_space<vmem>>, vector<8x128xf32>
    tpu.vector_store %arg2[%c0_4, %c0_5], %23 {strides = array<i32>} : memref<16x128xf32, #tpu.memory_space<vmem>>, vector<8x128xf32>,
    %c8 = arith.constant 8 : index
    %c0_6 = arith.constant 0 : index
    %28 = vector.load %arg2[%c8, %c0_6] : memref<16x128xf32, #tpu.memory_space<vmem>>, vector<8x128xf32>
    tpu.vector_store %arg2[%c8, %c0_6], %26 {strides = array<i32>} : memref<16x128xf32, #tpu.memory_space<vmem>>, vector<8x128xf32>,
    %c16_i32_7 = arith.constant 16 : i32
    %29 = tpu.dynamic_rotate %18 by %c16_i32_7 dim 1 : vector<8x128xf32>, i32 -> vector<8x128xf32>
    %c112_i32_8 = arith.constant 112 : i32
    %30 = tpu.dynamic_rotate %18 by %c112_i32_8 dim 1 : vector<8x128xf32>, i32 -> vector<8x128xf32>
    %31 = vector.shape_cast %6 : vector<1x128xi1> to vector<1x128xi1>
    %32 = vector.broadcast %31 : vector<1x128xi1> to vector<8x128xi1>
    %33 = arith.select %32, %18, %29 : vector<8x128xi1>, vector<8x128xf32>
    %34 = vector.shape_cast %6 : vector<1x128xi1> to vector<1x128xi1>
    %35 = vector.broadcast %34 : vector<1x128xi1> to vector<8x128xi1>
    %36 = arith.select %35, %30, %18 : vector<8x128xi1>, vector<8x128xf32>
    %c0_9 = arith.constant 0 : index
    %c0_10 = arith.constant 0 : index
    %37 = vector.load %arg3[%c0_9, %c0_10] : memref<16x128xf32, #tpu.memory_space<vmem>>, vector<8x128xf32>
    tpu.vector_store %arg3[%c0_9, %c0_10], %33 {strides = array<i32>} : memref<16x128xf32, #tpu.memory_space<vmem>>, vector<8x128xf32>,
    %c8_11 = arith.constant 8 : index
    %c0_12 = arith.constant 0 : index
    %38 = vector.load %arg3[%c8_11, %c0_12] : memref<16x128xf32, #tpu.memory_space<vmem>>, vector<8x128xf32>
    tpu.vector_store %arg3[%c8_11, %c0_12], %36 {strides = array<i32>} : memref<16x128xf32, #tpu.memory_space<vmem>>, vector<8x128xf32>,
    return
  }
  func.func @transform_0(%arg0: i32) -> (i32, i32) {
    %c0_i32 = arith.constant 0 : i32
    %c0_i32_0 = arith.constant 0 : i32
    %c0_i32_1 = arith.constant 0 : i32
    return %c0_i32, %c0_i32_0 : i32, i32
  }
  func.func @transform_1(%arg0: i32) -> (i32, i32) {
    %c0_i32 = arith.constant 0 : i32
    %c0_i32_0 = arith.constant 0 : i32
    return %arg0, %c0_i32 : i32, i32
  }
  func.func @transform_2(%arg0: i32) -> (i32, i32) {
    %c0_i32 = arith.constant 0 : i32
    %c0_i32_0 = arith.constant 0 : i32
    return %arg0, %c0_i32 : i32, i32
  }
}

</mosaic_0001>

<llo_original>
// kernel: tpu_custom_call.1
$region0: #{tpu_custom_call.1}
  #allocation0 [shape = 'u32[]', space=smem, size = 0x4, offset = 0x4, fixed_abs, tag = 'smem constant byte address 0x4 - core index']
  #allocation1 [shape = 'u32[144,128]{1,0:T(1,128)}', space=vmem, size = 0x12000, scoped, tag = 'internal scratch']
  %s0 = inlined_call_operand.hbm [shape: f32[3,128], index: 0, kind: input, shape index: {}]
  %s1 = inlined_call_operand.hbm [shape: f32[16,128], index: 1, kind: output, shape index: {0}]
  %s2 = inlined_call_operand.hbm [shape: f32[16,128], index: 2, kind: output, shape index: {1}]
  %3 = xla_tuple %s1, %s2
  %s4 = sld [smem:[#allocation0]]
  $region26: #{tpu_custom_call.1} parent=0
    _
  %s6 = ssub.s32 1, %s4
  %s7 = scalar_select 0, %s6, %s4
  $region1: #{tpu_custom_call.1} parent=0
    #allocation2 [shape = 'u8[2048]{0}', space=vmem, size = 0x800, scoped, tag = 'input window, operand 0, single buffered']
    #allocation3 [shape = 's32[1]{0}', space=sflag, size = 0x4, scoped, tag = 'scoped memory for tpu_custom_call.1']
    #allocation4 [shape = 's32[1]{0}', space=sflag, size = 0x4, scoped, tag = 'scoped memory for tpu_custom_call.1']
    #allocation5 [shape = 'u8[8192]{0}', space=vmem, size = 0x2000, scoped, tag = 'output window, operand 0, single buffered']
    #allocation6 [shape = 'u8[8192]{0}', space=vmem, size = 0x2000, scoped, tag = 'output window, operand 1, single buffered']
    #allocation7 [shape = 's32[1]{0}', space=sflag, size = 0x4, scoped, tag = 'scoped memory for tpu_custom_call.1']
    %8 = vsyncpa [#allocation3], 0
    %9 = vsyncpa [#allocation4], 0
    %10 = vsyncpa [#allocation7], 0
    // Predicated region
    $region2: #{tpu_custom_call.1} parent=1 // pred_check
      _
    $region3: #{tpu_custom_call.1} parent=1 // pred_check_branch
      %12 = sbr.rel (0) target = $region5
    $region4: #{tpu_custom_call.1} parent=1 // pred_region
      %s14 = ssub.s32 64, 64
      %15 = vsyncadd [#allocation3], %s14
      %s17 = sshll.u32 [#allocation2], 4
      %s18 = int_to_ptr.vmem [resolvable:$true] %s17
      %20 = dma.hbm_to_vmem [thread:$0]  %s0, 64, %s18, [#allocation3]
    $region5: #{tpu_custom_call.1} parent=1 // pred_fallthru
      _
    // Predicated region
    $region6: #{tpu_custom_call.1} parent=1 // pred_check
      _
    $region7: #{tpu_custom_call.1} parent=1 // pred_check_branch
      %22 = sbr.rel (0) target = $region9
    $region8: #{tpu_custom_call.1} parent=1 // pred_region
      %23 = dma.done [#allocation3], 64
    $region9: #{tpu_custom_call.1} parent=1 // pred_fallthru
      _
    %v24 = vld [vmem:[#allocation2] sm:$0x1]
    %s25 = smul.u32 0, 64
    %s26 = scvt.s32.f32 %s25
    %v27 = vld [vmem:[#allocation2 + $0x1] sm:$0x1]
    %v28 = vld [vmem:[#allocation2 + $0x2] sm:$0x1]
    %vm29 = vcmp.gt.f32.partialorder %v28, 0.5
    %v30 = vlaneseq
    %v31 = vshrl.u32 %v30, 7
    %v32 = vcvt.s32.f32 %v31
    %v33 = vmul.f32 %v32, 4.0
    %v34 = vstv %s26
    %v35 = vadd.f32 %v34, %v33
    %v36 = vlaneseq
    %v37 = vshrl.u32 %v36, 7
    %v38 = vsub.s32 0, %v37
    %v39 = vrot.slane %v27, %v38
    %v40 = vadd.f32 %v35, %v39
    %v41 = vlaneseq
    %v42 = vshrl.u32 %v41, 7
    %v43 = vsub.s32 0, %v42
    %v44 = vrot.slane %v24, %v43
    %v45 = vmul.f32 %v40, %v44
    %v46 = vand.u32 2147483647, %v45
    %vm47 = vcmp.le.f32.partialorder %v46, 0.7853982
    %vm48 = vcmp.lt.s32.totalorder %v45, 0
    %v49 = vand.u32 %v45, 2139095040
    %v50 = vshrl.u32 %v49, 23
    %v51 = vsub.s32 %v50, 127
    %v52 = vand.u32 2147483647, %v45
    %v53 = vand.u32 %v52, 8388607
    %v54 = vor.u32 %v53, 8388608
    %v55 = vsub.s32 0, %v54
    %v56 = vadd.s32 %v51, 1
    %vm57 = vcmp.gt.s32.totalorder %v56, 0
    %v58 = vsel %vm57, %v56, 0
    %v59 = vshrl.u32 %v58, 5
    %v60 = vand.u32 %v58, 31
    %v61 = vsub.s32 32, %v60
    %v62 = vshrl.u32 683565275, %v61
    %v63 = vshll.u32 683565275, %v60
    %v64 = vshrl.u32 2475754826, %v61
    %v65 = vor.u32 %v63, %v64
    %v66 = vshll.u32 2475754826, %v60
    %v67 = vshrl.u32 2131351028, %v61
    %v68 = vor.u32 %v66, %v67
    %v69 = vshll.u32 2131351028, %v60
    %v70 = vshrl.u32 2102212464, %v61
    %v71 = vor.u32 %v69, %v70
    %v72 = vshll.u32 2102212464, %v60
    %v73 = vshrl.u32 920167782, %v61
    %v74 = vor.u32 %v72, %v73
    %v75 = vshll.u32 920167782, %v60
    %v76 = vshrl.u32 1326507024, %v61
    %v77 = vor.u32 %v75, %v76
    %vm78 = vcmp.lt.s32.totalorder %v59, 1
    %vm79 = vcmp.lt.s32.totalorder %v59, 2
    %vm80 = vcmp.lt.s32.totalorder %v59, 3
    %vm81 = vcmp.lt.s32.totalorder %v59, 4
    %v82 = vsel %vm78, %v62, %v65
    %v83 = vsel %vm81, %v71, 2102212464
    %v84 = vsel %vm80, %v68, %v83
    %v85 = vsel %vm79, %v82, %v84
    %v86 = vsel %vm78, %v65, %v68
    %v87 = vsel %vm81, %v74, 920167782
    %v88 = vsel %vm80, %v71, %v87
    %v89 = vsel %vm79, %v86, %v88
    %v90 = vsel %vm78, %v68, %v71
    %v91 = vsel %vm81, %v77, 1326507024
    %v92 = vsel %vm80, %v74, %v91
    %v93 = vsel %vm79, %v90, %v92
    %v94 = vshll.u32 %v54, 8
    %v95 = vmul.u32.u64.compose %v94, %v93
    %v96 = vextract.low.u32 %v95
    %v97 = vextract.high.u32 %v95
    %v98 = vmul.u32.u64.compose %v94, %v89
    %v99 = vextract.low.u32 %v98
    %v100 = vextract.high.u32 %v98
    %v101 = vmul.u32 %v94, %v85
    %v102 = vadd.s32 %v97, %v99
    %vm103 = vc.u32 %v97, %v99
    %v104 = vadd.s32 %v100, 1
    %v105 = vsel %vm103, %v104, %v100
    %v106 = vadd.s32 %v101, %v105
    %v107 = vadd.s32 %v106, 536870912
    %v108 = vshrl.u32 %v107, 30
    %v109 = vshll.u32 %v108, 30
    %v110 = vsub.s32 %v106, %v109
    %vm111 = vcmp.lt.s32.totalorder %v110, 0
    %v112 = vsub.s32 0, %v110
    %v113 = vsel %vm111, %v112, %v110
    %v114 = vclz %v113
    %v115 = vsub.s32 %v114, 2
    %vm116 = vcmp.gt.s32.totalorder 0, %v115
    %v117 = vsel %vm116, 0, %v115
    %v118 = vsub.s32 32, %v117
    %v119 = vshll.u32 %v110, %v117
    %v120 = vshrl.u32 %v102, %v118
    %v121 = vor.u32 %v119, %v120
    %v122 = vsub.s32 4294967266, %v117
    %v123 = vadd.s32 %v122, 127
    %v124 = vshll.u32 %v123, 23
    %v125 = vor.u32 4788187, %v124
    %v126 = vand.u32 2147483647, %v125
    %v128 = vcvt.s32.f32 %v121
    %v129 = vmul.f32 %v128, %v126
    %v130 = vxor.u32 %v129, 2147483648
    %v131 = vsel %vm48, %v130, %v129
    %v132 = vsub.s32 4, %v108
    %v133 = vsel %vm48, %v132, %v108
    %v134 = vsel %vm47, %v45, %v131
    %v135 = vsel %vm47, 0, %v133
    %v136 = vcosq.f32.pop %v134
    %v137 = vsinq.f32.pop %v134
    %vm138 = vweird.f32 %v45
    %v139 = vand.u32 %v135, 3
    %vm140 = vcmp.lt.s32.totalorder %v139, 2
    %vm141 = vcmp.eq.s32.totalorder %v139, 0
    %v142 = vxor.u32 %v137, 2147483648
    %v143 = vsel %vm141, %v136, %v142
    %vm144 = vcmp.eq.s32.totalorder %v139, 2
    %v145 = vxor.u32 %v136, 2147483648
    %v146 = vsel %vm144, %v145, %v137
    %v147 = vsel %vm140, %v143, %v146
    %v148 = vsel %vm138, nan, %v147
    %v149 = vand.u32 2147483647, %v45
    %vm150 = vcmp.le.f32.partialorder %v149, 0.7853982
    %vm151 = vcmp.lt.s32.totalorder %v45, 0
    %v152 = vand.u32 %v45, 2139095040
    %v153 = vshrl.u32 %v152, 23
    %v154 = vsub.s32 %v153, 127
    %v155 = vand.u32 2147483647, %v45
    %v156 = vand.u32 %v155, 8388607
    %v157 = vor.u32 %v156, 8388608
    %v158 = vsub.s32 0, %v157
    %v159 = vadd.s32 %v154, 1
    %vm160 = vcmp.gt.s32.totalorder %v159, 0
    %v161 = vsel %vm160, %v159, 0
    %v162 = vshrl.u32 %v161, 5
    %v163 = vand.u32 %v161, 31
    %v164 = vsub.s32 32, %v163
    %v165 = vshrl.u32 683565275, %v164
    %v166 = vshll.u32 683565275, %v163
    %v167 = vshrl.u32 2475754826, %v164
    %v168 = vor.u32 %v166, %v167
    %v169 = vshll.u32 2475754826, %v163
    %v170 = vshrl.u32 2131351028, %v164
    %v171 = vor.u32 %v169, %v170
    %v172 = vshll.u32 2131351028, %v163
    %v173 = vshrl.u32 2102212464, %v164
    %v174 = vor.u32 %v172, %v173
    %v175 = vshll.u32 2102212464, %v163
    %v176 = vshrl.u32 920167782, %v164
    %v177 = vor.u32 %v175, %v176
    %v178 = vshll.u32 920167782, %v163
    %v179 = vshrl.u32 1326507024, %v164
    %v180 = vor.u32 %v178, %v179
    %vm181 = vcmp.lt.s32.totalorder %v162, 1
    %vm182 = vcmp.lt.s32.totalorder %v162, 2
    %vm183 = vcmp.lt.s32.totalorder %v162, 3
    %vm184 = vcmp.lt.s32.totalorder %v162, 4
    %v185 = vsel %vm181, %v165, %v168
    %v186 = vsel %vm184, %v174, 2102212464
    %v187 = vsel %vm183, %v171, %v186
    %v188 = vsel %vm182, %v185, %v187
    %v189 = vsel %vm181, %v168, %v171
    %v190 = vsel %vm184, %v177, 920167782
    %v191 = vsel %vm183, %v174, %v190
    %v192 = vsel %vm182, %v189, %v191
    %v193 = vsel %vm181, %v171, %v174
    %v194 = vsel %vm184, %v180, 1326507024
    %v195 = vsel %vm183, %v177, %v194
    %v196 = vsel %vm182, %v193, %v195
    %v197 = vshll.u32 %v157, 8
    %v198 = vmul.u32.u64.compose %v197, %v196
    %v199 = vextract.low.u32 %v198
    %v200 = vextract.high.u32 %v198
    %v201 = vmul.u32.u64.compose %v197, %v192
    %v202 = vextract.low.u32 %v201
    %v203 = vextract.high.u32 %v201
    %v204 = vmul.u32 %v197, %v188
    %v205 = vadd.s32 %v200, %v202
    %vm206 = vc.u32 %v200, %v202
    %v207 = vadd.s32 %v203, 1
    %v208 = vsel %vm206, %v207, %v203
    %v209 = vadd.s32 %v204, %v208
    %v210 = vadd.s32 %v209, 536870912
    %v211 = vshrl.u32 %v210, 30
    %v212 = vshll.u32 %v211, 30
    %v213 = vsub.s32 %v209, %v212
    %vm214 = vcmp.lt.s32.totalorder %v213, 0
    %v215 = vsub.s32 0, %v213
    %v216 = vsel %vm214, %v215, %v213
    %v217 = vclz %v216
    %v218 = vsub.s32 %v217, 2
    %vm219 = vcmp.gt.s32.totalorder 0, %v218
    %v220 = vsel %vm219, 0, %v218
    %v221 = vsub.s32 32, %v220
    %v222 = vshll.u32 %v213, %v220
    %v223 = vshrl.u32 %v205, %v221
    %v224 = vor.u32 %v222, %v223
    %v225 = vsub.s32 4294967266, %v220
    %v226 = vadd.s32 %v225, 127
    %v227 = vshll.u32 %v226, 23
    %v228 = vor.u32 4788187, %v227
    %v229 = vand.u32 2147483647, %v228
    %v231 = vcvt.s32.f32 %v224
    %v232 = vmul.f32 %v231, %v229
    %v233 = vxor.u32 %v232, 2147483648
    %v234 = vsel %vm151, %v233, %v232
    %v235 = vsub.s32 4, %v211
    %v236 = vsel %vm151, %v235, %v211
    %v237 = vsel %vm150, %v45, %v234
    %v238 = vsel %vm150, 0, %v236
    %v239 = vcosq.f32.pop %v237
    %v240 = vsinq.f32.pop %v237
    %vm241 = vweird.f32 %v45
    %v242 = vadd.s32 %v238, 3
    %v243 = vand.u32 %v242, 3
    %vm244 = vcmp.lt.s32.totalorder %v243, 2
    %vm245 = vcmp.eq.s32.totalorder %v243, 0
    %v246 = vxor.u32 %v240, 2147483648
    %v247 = vsel %vm245, %v239, %v246
    %vm248 = vcmp.eq.s32.totalorder %v243, 2
    %v249 = vxor.u32 %v239, 2147483648
    %v250 = vsel %vm248, %v249, %v240
    %v251 = vsel %vm244, %v247, %v250
    %v252 = vsel %vm241, nan, %v251
    %253 = vrot.lane.b32.xlu0 %v148, 16
    %v254 = vpop.permute.xlu0 %253
    %255 = vrot.lane.b32.xlu0 %v148, 112
    %v256 = vpop.permute.xlu0 %255
    %v257 = vsel %vm29, 1, 0
    %v258 = vlaneseq
    %v259 = vshrl.u32 %v258, 7
    %v260 = vsub.s32 0, %v259
    %v261 = vrot.slane %v257, %v260
    %vm262 = vcmp.eq.s32.totalorder %v261, 1
    %v263 = vsel %vm262, %v148, %v254
    %v264 = vsel %vm262, %v256, %v148
    %265 = vst [vmem:[#allocation5] sm:$0xff] %v263
    %266 = vst [vmem:[#allocation5 + $0x8] sm:$0xff] %v264
    %267 = vrot.lane.b32.xlu0 %v252, 16
    %v268 = vpop.permute.xlu0 %267
    %269 = vrot.lane.b32.xlu0 %v252, 112
    %v270 = vpop.permute.xlu0 %269
    %v271 = vsel %vm262, %v252, %v268
    %v272 = vsel %vm262, %v270, %v252
    %273 = vst [vmem:[#allocation6] sm:$0xff] %v271
    %274 = vst [vmem:[#allocation6 + $0x8] sm:$0xff] %v272
    // Predicated region
    $region10: #{tpu_custom_call.1} parent=1 // pred_check
      _
    $region11: #{tpu_custom_call.1} parent=1 // pred_check_branch
      %276 = sbr.rel (0) target = $region13
    $region12: #{tpu_custom_call.1} parent=1 // pred_region
      %s278 = ssub.s32 256, 256
      %279 = vsyncadd [#allocation4], %s278
      %s280 = sshll.u32 [#allocation5], 4
      %s281 = int_to_ptr.vmem [resolvable:$true] %s280
      %286 = dma.vmem_to_hbm [thread:$0]  %s281, 256, %s1, [#allocation4], 128, 128, 8
    $region13: #{tpu_custom_call.1} parent=1 // pred_fallthru
      _
    // Predicated region
    $region14: #{tpu_custom_call.1} parent=1 // pred_check
      _
    $region15: #{tpu_custom_call.1} parent=1 // pred_check_branch
      %288 = sbr.rel (0) target = $region17
    $region16: #{tpu_custom_call.1} parent=1 // pred_region
      %s290 = ssub.s32 256, 256
      %291 = vsyncadd [#allocation7], %s290
      %s292 = sshll.u32 [#allocation6], 4
      %s293 = int_to_ptr.vmem [resolvable:$true] %s292
      %298 = dma.vmem_to_hbm [thread:$0]  %s293, 256, %s2, [#allocation7], 128, 128, 8
    $region17: #{tpu_custom_call.1} parent=1 // pred_fallthru
      _
    // Predicated region
    $region18: #{tpu_custom_call.1} parent=1 // pred_check
      _
    $region19: #{tpu_custom_call.1} parent=1 // pred_check_branch
      %300 = sbr.rel (0) target = $region21
    $region20: #{tpu_custom_call.1} parent=1 // pred_region
      %301 = dma.done [#allocation4], 256
    $region21: #{tpu_custom_call.1} parent=1 // pred_fallthru
      _
    // Predicated region
    $region22: #{tpu_custom_call.1} parent=1 // pred_check
      _
    $region23: #{tpu_custom_call.1} parent=1 // pred_check_branch
      %303 = sbr.rel (0) target = $region25
    $region24: #{tpu_custom_call.1} parent=1 // pred_region
      %304 = dma.done [#allocation7], 256
    $region25: #{tpu_custom_call.1} parent=1 // pred_fallthru
      _
    %305 = vsyncpa [#allocation3], 1
    %306 = vsyncpa [#allocation4], 1
    %307 = vsyncpa [#allocation7], 1

</llo_original>
